<compile_context>
chip_gen: v6e
topology: v6e:2x2x1
jax: 0.10.0
libtpu: 0.0.40
codegen_flags: <defaults>
</compile_context>

<pallas_src>
import functools

import jax
import jax.numpy as jnp
from jax.experimental import pallas as pl
from jax.experimental.pallas import tpu as pltpu


# ---------------------------------------------------------------------------
# Kernel
# ---------------------------------------------------------------------------
def _flce_kernel(x_ref, w_ref, b_ref, t_ref, out_ref, stat_sc,
                 *, tile_v, ignore_index, z_scale):
    j = pl.program_id(1)

    @pl.when(j == 0)
    def _():
        # stat_sc columns: 0 = running max (-inf), 1 = running sum-exp (0),
        #                  2 = target logit (0); cols 3..7 unused padding.
        col0 = jax.lax.broadcasted_iota(jnp.int32, stat_sc.shape, 1)
        stat_sc[...] = jnp.where(col0 == 0, -jnp.inf, 0.0).astype(jnp.float32)

    # logits chunk (TN, TV): contract H (dim 1) of x against H (dim 1) of w.
    # Native-dtype operands straight into the MXU, f32 accumulation.
    # TODO(synk): verify on v5e that this transposed-RHS form lowers without a
    # vxpose of the weight tile; if it does, pre-transpose weight to [H, V].
    logits = jax.lax.dot_general(
        x_ref[...], w_ref[...],
        dimension_numbers=(((1,), (1,)), ((), ())),
        preferred_element_type=jnp.float32,
    ) + b_ref[...].astype(jnp.float32)            # b_ref is (1, TV), broadcasts

    # online logsumexp over vocab chunks
    m_prev = stat_sc[:, 0:1]
    l_prev = stat_sc[:, 1:2]
    m_new = jnp.maximum(m_prev, logits.max(axis=-1, keepdims=True))
    p = jnp.exp(logits - m_new)
    l_new = l_prev * jnp.exp(m_prev - m_new) + p.sum(axis=-1, keepdims=True)

    # gather the target logit if the target class lands in this vocab chunk.
    # ignore_index (-100) can never equal a column id >= 0, so no extra mask.
    t_local = t_ref[...].astype(jnp.int32) - j * tile_v                # (TN, 1)
    col = jax.lax.broadcasted_iota(jnp.int32, logits.shape, 1)         # (TN, TV)
    tgt_new = stat_sc[:, 2:3] + jnp.sum(
        jnp.where(col == t_local, logits, 0.0), axis=-1, keepdims=True)

    stat_sc[:, 0:1] = m_new
    stat_sc[:, 1:2] = l_new
    stat_sc[:, 2:3] = tgt_new

    @pl.when(j == pl.num_programs(1) - 1)
    def _():
        lse = stat_sc[:, 0:1] + jnp.log(stat_sc[:, 1:2])               # (TN, 1)
        ce = lse - stat_sc[:, 2:3]
        zl = jnp.float32(z_scale) * lse * lse
        valid = t_ref[...].astype(jnp.int32) != ignore_index
        tot = jnp.where(valid, ce + zl, 0.0)      # per-token total loss
        zpt = jnp.where(valid, zl, 0.0)           # per-token z-loss
        out_ref[...] = jnp.concatenate([tot, zpt], axis=-1)            # (TN, 2)


# ---------------------------------------------------------------------------
# Tiling / sizing helpers
# ---------------------------------------------------------------------------
def _round_up(x, m):
    return ((x + m - 1) // m) * m


def _largest_aligned_divisor(total, align, cap):
    """Largest multiple of `align` that divides `total` and is <= cap.
    `total` must itself be a multiple of `align`."""
    t = (min(cap, total) // align) * align
    while t > align:
        if total % t == 0:
            return t
        t -= align
    return align


def _vmem_capacity_bytes():
    try:
        cap = getattr(pltpu.get_tpu_info(), "vmem_capacity_bytes", None)
        if cap:
            return int(cap)
    except Exception:
        pass
    return 64 << 20        # conservative fallback (v7x-sized); safe everywhere


def _num_tensorcores():
    try:
        info = pltpu.get_tpu_info()
        for name in ("num_cores", "core_count", "num_tensorcores",
                     "tensorcore_count"):
            v = getattr(info, name, None)
            if isinstance(v, int) and v > 0:
                return v
    except Exception:
        pass
    return 1               # v5e / v6e behaviour (single TensorCore)


def _vmem_usage(tile_n, tile_v, H, x_bytes, w_bytes):
    """Estimated VMEM footprint: double-buffered inputs, f32 intermediates,
    lane-padded small buffers."""
    return (2 * tile_n * H * x_bytes          # x tile (double-buffered)
            + 2 * tile_v * H * w_bytes        # weight chunk (double-buffered)
            + 2 * tile_v * 4                  # bias chunk
            + 2 * tile_n * 4                  # targets
            + 2 * tile_n * 128 * 4            # packed (tile_n, 2) output (lane-padded)
            + tile_n * 128 * 4                # merged (tile_n, 8) stats scratch
            + 5 * tile_n * tile_v * 4)        # logits / exp / iota / select temps


def _select_tiles(N, V, H, x_bytes, w_bytes, budget, cores,
                  tile_n_max, tile_v_max):
    # --- token tile: keep it large (sets weight-reuse arithmetic intensity);
    # alignment grows with N so tiny problems aren't padded 16x.
    if N < 128:
        n_align = 8
    elif N < 2048:
        n_align = 128
    else:
        n_align = 256
    n_pad = _round_up(N, n_align)
    tn_cap = min(tile_n_max, n_pad)
    tile_n = _largest_aligned_divisor(n_pad, n_align, tn_cap)
    if n_pad >= 1024 and tile_n < 512:
        # Awkward N: rather than collapsing tile_n (kills weight reuse), try a
        # 128-aligned divisor, else pad N up to a full roofline-sized tile.
        alt = _largest_aligned_divisor(n_pad, 128, tn_cap)
        if alt >= 512:
            tile_n = alt
        else:
            tile_n = tn_cap
            n_pad = _round_up(N, tile_n)

    # Megacore: split the token axis only when >1 TensorCore is detected AND
    # the halved tile still sits above the MXU/HBM roofline (>= 512 tokens).
    if cores > 1 and (n_pad // tile_n) < cores and tile_n >= 1024:
        tile_n //= 2

    # --- vocab tile: shrink this (never tile_n) until the budget is met.
    v_cap = min(tile_v_max, _round_up(V, 128))
    v_cands = sorted({v_cap,
                      *(c for c in (2048, 1024, 512, 256, 128) if c <= v_cap)},
                     reverse=True)
    while True:
        for tv in v_cands:
            if _vmem_usage(tile_n, tv, H, x_bytes, w_bytes) <= budget:
                return n_pad, tile_n, tv
        # Last resort (enormous H): the x tile itself doesn't fit -> halve tile_n.
        new_tn = max(n_align, (tile_n // 2) // n_align * n_align)
        if new_tn == tile_n:
            return n_pad, tile_n, v_cands[-1]     # smallest config; let it ride
        tile_n = new_tn
        n_pad = _round_up(N, tile_n)


# ---------------------------------------------------------------------------
# Wrapper
# ---------------------------------------------------------------------------
@functools.partial(jax.jit, static_argnames=("ignore_index", "z_scale",
                                             "compute_dtype", "tile_n_max",
                                             "tile_v_max"))
def fused_linear_cross_entropy(x, weight, bias, target, *, ignore_index=-100,
                               z_scale=0.0, compute_dtype=None,
                               tile_n_max=1024, tile_v_max=2048):
    """x: [N, H], weight: [V, H] (nn.Linear layout), bias: [V] or None, target: [N]."""
    N, H = x.shape
    V, Hw = weight.shape
    assert H == Hw and target.shape == (N,)

    if compute_dtype is not None:                 # bf16 operands, f32 accumulation
        x = x.astype(compute_dtype)
        weight = weight.astype(compute_dtype)
    if bias is None:
        bias = jnp.zeros((V,), jnp.float32)
    bias = bias.astype(jnp.float32)
    assert bias.shape == (V,)

    cap = _vmem_capacity_bytes()
    budget = int(cap * 0.72)                      # headroom for Mosaic scratch
    n_pad, tile_n, tile_v = _select_tiles(
        N, V, H, x.dtype.itemsize, weight.dtype.itemsize, budget,
        _num_tensorcores(), tile_n_max, tile_v_max)
    v_pad = _round_up(V, tile_v)

    # Pad tokens (ignored rows) and vocab (zero weight rows + -1e30 bias so
    # padded columns never win the max, never add to sum-exp, never match a
    # target).
    if n_pad > N:
        x = jnp.pad(x, ((0, n_pad - N), (0, 0)))
    if v_pad > V:
        weight = jnp.pad(weight, ((0, v_pad - V), (0, 0)))
        bias = jnp.pad(bias, (0, v_pad - V), constant_values=-1e30)
    target2d = jnp.pad(target.astype(jnp.int32), (0, n_pad - N),
                       constant_values=ignore_index).reshape(n_pad, 1)
    bias2d = bias.reshape(1, v_pad)

    grid = (n_pad // tile_n, v_pad // tile_v)
    kernel = functools.partial(_flce_kernel, tile_v=tile_v,
                               ignore_index=ignore_index, z_scale=z_scale)

    cost = pl.CostEstimate(
        flops=2 * n_pad * v_pad * H,
        transcendentals=n_pad * v_pad,
        bytes_accessed=(grid[0] * v_pad * H * weight.dtype.itemsize  # weight stream / token tile
                        + n_pad * H * x.dtype.itemsize
                        + grid[0] * v_pad * 4 + n_pad * 12))

    out = pl.pallas_call(
        kernel,
        out_shape=jax.ShapeDtypeStruct((n_pad, 2), jnp.float32),
        grid_spec=pltpu.PrefetchScalarGridSpec(
            num_scalar_prefetch=0,
            grid=grid,
            in_specs=[
                pl.BlockSpec((tile_n, H), lambda i, j: (i, 0)),    # x (resident over j)
                pl.BlockSpec((tile_v, H), lambda i, j: (j, 0)),    # weight chunk (streamed)
                pl.BlockSpec((1, tile_v), lambda i, j: (0, j)),    # bias chunk
                pl.BlockSpec((tile_n, 1), lambda i, j: (i, 0)),    # targets
            ],
            out_specs=pl.BlockSpec((tile_n, 2), lambda i, j: (i, 0)),
            scratch_shapes=[pltpu.VMEM((tile_n, 8), jnp.float32)],  # m / l / tgt cols
        ),
        compiler_params=pltpu.CompilerParams(
            dimension_semantics=("parallel", "arbitrary"),
            vmem_limit_bytes=int(cap * 0.85)),
        cost_estimate=cost,
    )(x, weight, bias2d, target2d)

    # Padded token rows contribute exactly 0, so summing the padded output is safe.
    # TODO(synk): out-of-range targets (other than ignore_index) silently yield
    # ce = lse (no target logit found) instead of erroring like PyTorch.
    ce_tok = out[:, 0]
    z_tok = out[:, 1]
    n_valid = jnp.maximum(jnp.sum(target != ignore_index), 1).astype(jnp.float32)
    loss = jnp.sum(ce_tok) / n_valid              # includes z-loss (liger semantics)
    z_loss = jnp.sum(z_tok) / n_valid
    return loss, z_loss


class FusedLinearCrossEntropy:
    """JAX/Pallas port of the PyTorch FusedLinearCrossEntropy module (forward).

    `compute_dtype=jnp.bfloat16` (default, per perf review) casts x / weight at
    the call site -- bf16 operands run the MXU at full rate on every TPU
    generation and halve weight HBM/VMEM traffic; accumulation stays f32.
    Pass compute_dtype=None to keep the operands' native dtype.
    """

    def __init__(self, weight, bias=None, ignore_index=-100, z_loss=0.0,
                 compute_dtype=jnp.bfloat16):
        self.weight = weight      # [V, H]  (nn.Linear weight layout)
        self.bias = bias          # [V] or None
        self.ignore_index = ignore_index
        self.z_loss = z_loss
        self.compute_dtype = compute_dtype

    def __call__(self, inputs, target):
        use_z_loss = self.z_loss > 0
        x = inputs.reshape(-1, inputs.shape[-1])
        t = target.reshape(-1)
        loss, z_loss = fused_linear_cross_entropy(
            x, self.weight, self.bias, t,
            ignore_index=self.ignore_index, z_scale=self.z_loss,
            compute_dtype=self.compute_dtype)
        loss_dict = {"cross entropy": loss}
        if use_z_loss:
            loss_dict["z-loss"] = z_loss          # already a mean over valid tokens
            loss_dict["cross entropy"] = loss_dict["cross entropy"] - z_loss
        return loss, loss_dict


# ---------------------------------------------------------------------------
# Reference + self-test
# ---------------------------------------------------------------------------
def _reference(x, weight, bias, target, ignore_index, z_scale, compute_dtype=None):
    if compute_dtype is not None:
        x = x.astype(compute_dtype)
        weight = weight.astype(compute_dtype)
    logits = (x.astype(jnp.float32) @ weight.astype(jnp.float32).T
              + bias.astype(jnp.float32))
    lse = jax.nn.logsumexp(logits, axis=-1)
    safe_t = jnp.where(target == ignore_index, 0, target)
    tgt_logit = jnp.take_along_axis(logits, safe_t[:, None], axis=-1)[:, 0]
    valid = target != ignore_index
    ce = jnp.where(valid, lse - tgt_logit, 0.0)
    zl = jnp.where(valid, z_scale * lse * lse, 0.0)
    n = jnp.maximum(jnp.sum(valid), 1).astype(jnp.float32)
    return jnp.sum(ce + zl) / n, jnp.sum(zl) / n


if __name__ == "__main__":
    key = jax.random.PRNGKey(0)
    batch, seq, hidden, vocab = 2, 8, 32, 256
    ignore_index = -100
    z_loss_scale = 0.1

    k_x, k_w, k_b, k_t = jax.random.split(key, 4)
    x = jax.random.normal(k_x, (batch, seq, hidden), dtype=jnp.float32)
    weight = jax.random.normal(k_w, (vocab, hidden), dtype=jnp.float32) * 0.02
    bias = jax.random.normal(k_b, (vocab,), dtype=jnp.float32) * 0.01
    target = jax.random.randint(k_t, (batch, seq), 0, vocab, dtype=jnp.int32)
    target = target.at[0, 0].set(ignore_index)      # sprinkle ignored positions
    target = target.at[1, 3].set(ignore_index)

    x2d = x.reshape(-1, hidden)
    t1d = target.reshape(-1)

    # 1) native-dtype (f32 operand) path -- tight tolerance.
    loss32, z32 = fused_linear_cross_entropy(
        x2d, weight, bias, t1d, ignore_index=ignore_index, z_scale=z_loss_scale,
        compute_dtype=None)
    loss32, z32 = jax.block_until_ready((loss32, z32))
    ref_loss, ref_z = _reference(x2d, weight, bias, t1d, ignore_index, z_loss_scale)
    assert jnp.allclose(loss32, ref_loss, rtol=1e-5, atol=1e-5)
    assert jnp.allclose(z32, ref_z, rtol=1e-5, atol=1e-5)

    # 2) module path (bf16 operands by default, f32 accumulation).
    module = FusedLinearCrossEntropy(weight, bias, ignore_index=ignore_index,
                                     z_loss=z_loss_scale)
    loss, loss_dict = module(x, target)
    loss = jax.block_until_ready(loss)
    loss_dict = jax.tree_util.tree_map(jax.block_until_ready, loss_dict)
    bref_loss, bref_z = _reference(x2d, weight, bias, t1d, ignore_index,
                                   z_loss_scale, compute_dtype=jnp.bfloat16)
    assert jnp.allclose(loss, bref_loss, rtol=2e-2, atol=2e-2)
    assert jnp.allclose(loss_dict["z-loss"], bref_z, rtol=2e-2, atol=2e-2)
    assert jnp.allclose(loss_dict["cross entropy"], bref_loss - bref_z,
                        rtol=2e-2, atol=2e-2)

    # 3) all-tokens-ignored path exercises the n_valid clamp.
    t_ign = jnp.full_like(t1d, ignore_index)
    loss_ign, z_ign = fused_linear_cross_entropy(
        x2d, weight, bias, t_ign, ignore_index=ignore_index, z_scale=z_loss_scale,
        compute_dtype=None)
    loss_ign, z_ign = jax.block_until_ready((loss_ign, z_ign))
    assert jnp.allclose(loss_ign, 0.0, atol=1e-6)
    assert jnp.allclose(z_ign, 0.0, atol=1e-6)

    print("KERNEL_OK")
</pallas_src>

<mosaic_0001>
module attributes {stable_mosaic.version = 11 : i64} {
  func.func @_flce_kernel(%arg0: i32, %arg1: i32, %arg2: memref<16x32xf32, #tpu.memory_space<vmem>>, %arg3: memref<256x32xf32, #tpu.memory_space<vmem>>, %arg4: memref<1x256xf32, #tpu.memory_space<vmem>>, %arg5: memref<16x1xi32, #tpu.memory_space<vmem>>, %arg6: memref<16x2xf32, #tpu.memory_space<vmem>>, %arg7: memref<16x8xf32, #tpu.memory_space<vmem>>) attributes {dimension_semantics = [#tpu.dimension_semantics<parallel>, #tpu.dimension_semantics<arbitrary>], iteration_bounds = array<i64: 1, 1>, scalar_prefetch = 0 : i64, scratch_operands = 1 : i64, tpu.core_type = #tpu.core_type<tc>, window_params = [{transform_indices = @transform_0, window_bounds = array<i64: 16, 32>}, {transform_indices = @transform_1, window_bounds = array<i64: 256, 32>}, {transform_indices = @transform_2, window_bounds = array<i64: 1, 256>}, {transform_indices = @transform_3, window_bounds = array<i64: 16, 1>}, {transform_indices = @transform_4, window_bounds = array<i64: 16, 2>}]} {
    %c0_i32 = arith.constant 0 : i32
    %0 = arith.cmpi eq, %arg1, %c0_i32 : i32
    %1 = arith.extui %0 : i1 to i32
    %c0_i32_0 = arith.constant 0 : i32
    %2 = arith.cmpi ne, %1, %c0_i32_0 : i32
    scf.if %2 {
      %42 = tpu.iota {dimensions = array<i32: 1>} : vector<16x8xi32>
      %c0_i32_24 = arith.constant 0 : i32
      %43 = vector.broadcast %c0_i32_24 : i32 to vector<16x8xi32>
      %44 = arith.cmpi eq, %42, %43 : vector<16x8xi32>
      %cst_25 = arith.constant 0xFF800000 : f32
      %cst_26 = arith.constant 0.000000e+00 : f32
      %45 = vector.broadcast %cst_25 : f32 to vector<16x8xf32>
      %46 = vector.broadcast %cst_26 : f32 to vector<16x8xf32>
      %47 = arith.select %44, %45, %46 : vector<16x8xi1>, vector<16x8xf32>
      %c0_27 = arith.constant 0 : index
      %c0_28 = arith.constant 0 : index
      %48 = vector.load %arg7[%c0_27, %c0_28] : memref<16x8xf32, #tpu.memory_space<vmem>>, vector<16x8xf32>
      tpu.vector_store %arg7[%c0_27, %c0_28], %47 {strides = array<i32>} : memref<16x8xf32, #tpu.memory_space<vmem>>, vector<16x8xf32>,
    } else {
    }
    %c0 = arith.constant 0 : index
    %c0_1 = arith.constant 0 : index
    %3 = vector.load %arg2[%c0, %c0_1] : memref<16x32xf32, #tpu.memory_space<vmem>>, vector<16x32xf32>
    %c0_2 = arith.constant 0 : index
    %c0_3 = arith.constant 0 : index
    %4 = vector.load %arg3[%c0_2, %c0_3] : memref<256x32xf32, #tpu.memory_space<vmem>>, vector<256x32xf32>
    %cst = arith.constant dense<0.000000e+00> : vector<16x256xf32>
    %5 = tpu.matmul %3, %4, %cst {dimension_numbers = #tpu.dot_dimension_numbers<[1], [1], [0], [0], [0, 0, 1, 0], [], []>} : vector<16x32xf32>, vector<256x32xf32>, vector<16x256xf32> -> vector<16x256xf32>
    %c0_4 = arith.constant 0 : index
    %c0_5 = arith.constant 0 : index
    %6 = vector.load %arg4[%c0_4, %c0_5] : memref<1x256xf32, #tpu.memory_space<vmem>>, vector<1x256xf32>
    %7 = vector.broadcast %6 : vector<1x256xf32> to vector<16x256xf32>
    %8 = arith.addf %5, %7 : vector<16x256xf32>
    %c0_6 = arith.constant 0 : index
    %c0_7 = arith.constant 0 : index
    %9 = vector.load %arg7[%c0_6, %c0_7] : memref<16x8xf32, #tpu.memory_space<vmem>>, vector<16x1xf32>
    %c0_8 = arith.constant 0 : index
    %c1 = arith.constant 1 : index
    %10 = vector.load %arg7[%c0_8, %c1] : memref<16x8xf32, #tpu.memory_space<vmem>>, vector<16x1xf32>
    %cst_9 = arith.constant dense<0xFF800000> : vector<16xf32>
    %11 = vector.multi_reduction <maximumf>, %8, %cst_9 [1] : vector<16x256xf32> to vector<16xf32>
    %12 = vector.shape_cast %11 : vector<16xf32> to vector<16x1xf32>
    %13 = arith.maximumf %9, %12 : vector<16x1xf32>
    %14 = vector.broadcast %13 : vector<16x1xf32> to vector<16x256xf32>
    %15 = arith.subf %8, %14 : vector<16x256xf32>
    %16 = math.exp %15 : vector<16x256xf32>
    %17 = arith.subf %9, %13 : vector<16x1xf32>
    %18 = math.exp %17 : vector<16x1xf32>
    %19 = arith.mulf %10, %18 : vector<16x1xf32>
    %cst_10 = arith.constant dense<0.000000e+00> : vector<16xf32>
    %20 = vector.multi_reduction <add>, %16, %cst_10 [1] : vector<16x256xf32> to vector<16xf32>
    %21 = vector.shape_cast %20 : vector<16xf32> to vector<16x1xf32>
    %22 = arith.addf %19, %21 : vector<16x1xf32>
    %c0_11 = arith.constant 0 : index
    %c0_12 = arith.constant 0 : index
    %23 = vector.load %arg5[%c0_11, %c0_12] : memref<16x1xi32, #tpu.memory_space<vmem>>, vector<16x1xi32>
    %c256_i32 = arith.constant 256 : i32
    %24 = arith.muli %arg1, %c256_i32 : i32
    %25 = vector.broadcast %24 : i32 to vector<16x1xi32>
    %26 = arith.subi %23, %25 : vector<16x1xi32>
    %27 = tpu.iota {dimensions = array<i32: 1>} : vector<16x256xi32>
    %c0_13 = arith.constant 0 : index
    %c2 = arith.constant 2 : index
    %28 = vector.load %arg7[%c0_13, %c2] : memref<16x8xf32, #tpu.memory_space<vmem>>, vector<16x1xf32>
    %29 = vector.broadcast %26 : vector<16x1xi32> to vector<16x256xi32>
    %30 = arith.cmpi eq, %27, %29 : vector<16x256xi32>
    %cst_14 = arith.constant 0.000000e+00 : f32
    %31 = vector.broadcast %cst_14 : f32 to vector<16x256xf32>
    %32 = arith.select %30, %8, %31 : vector<16x256xi1>, vector<16x256xf32>
    %cst_15 = arith.constant dense<0.000000e+00> : vector<16xf32>
    %33 = vector.multi_reduction <add>, %32, %cst_15 [1] : vector<16x256xf32> to vector<16xf32>
    %34 = vector.shape_cast %33 : vector<16xf32> to vector<16x1xf32>
    %35 = arith.addf %28, %34 : vector<16x1xf32>
    %c0_16 = arith.constant 0 : index
    %c0_17 = arith.constant 0 : index
    %36 = vector.load %arg7[%c0_16, %c0_17] : memref<16x8xf32, #tpu.memory_space<vmem>>, vector<16x1xf32>
    tpu.vector_store %arg7[%c0_16, %c0_17], %13 {strides = array<i32>} : memref<16x8xf32, #tpu.memory_space<vmem>>, vector<16x1xf32>,
    %c0_18 = arith.constant 0 : index
    %c1_19 = arith.constant 1 : index
    %37 = vector.load %arg7[%c0_18, %c1_19] : memref<16x8xf32, #tpu.memory_space<vmem>>, vector<16x1xf32>
    tpu.vector_store %arg7[%c0_18, %c1_19], %22 {strides = array<i32>} : memref<16x8xf32, #tpu.memory_space<vmem>>, vector<16x1xf32>,
    %c0_20 = arith.constant 0 : index
    %c2_21 = arith.constant 2 : index
    %38 = vector.load %arg7[%c0_20, %c2_21] : memref<16x8xf32, #tpu.memory_space<vmem>>, vector<16x1xf32>
    tpu.vector_store %arg7[%c0_20, %c2_21], %35 {strides = array<i32>} : memref<16x8xf32, #tpu.memory_space<vmem>>, vector<16x1xf32>,
    %c0_i32_22 = arith.constant 0 : i32
    %39 = arith.cmpi eq, %arg1, %c0_i32_22 : i32
    %40 = arith.extui %39 : i1 to i32
    %c0_i32_23 = arith.constant 0 : i32
    %41 = arith.cmpi ne, %40, %c0_i32_23 : i32
    scf.if %41 {
      %c0_24 = arith.constant 0 : index
      %c0_25 = arith.constant 0 : index
      %42 = vector.load %arg7[%c0_24, %c0_25] : memref<16x8xf32, #tpu.memory_space<vmem>>, vector<16x1xf32>
      %c0_26 = arith.constant 0 : index
      %c1_27 = arith.constant 1 : index
      %43 = vector.load %arg7[%c0_26, %c1_27] : memref<16x8xf32, #tpu.memory_space<vmem>>, vector<16x1xf32>
      %44 = math.log %43 : vector<16x1xf32>
      %45 = arith.addf %42, %44 : vector<16x1xf32>
      %c0_28 = arith.constant 0 : index
      %c2_29 = arith.constant 2 : index
      %46 = vector.load %arg7[%c0_28, %c2_29] : memref<16x8xf32, #tpu.memory_space<vmem>>, vector<16x1xf32>
      %47 = arith.subf %45, %46 : vector<16x1xf32>
      %cst_30 = arith.constant 1.000000e-01 : f32
      %48 = vector.broadcast %cst_30 : f32 to vector<16x1xf32>
      %49 = arith.mulf %48, %45 : vector<16x1xf32>
      %50 = arith.mulf %49, %45 : vector<16x1xf32>
      %c0_31 = arith.constant 0 : index
      %c0_32 = arith.constant 0 : index
      %51 = vector.load %arg5[%c0_31, %c0_32] : memref<16x1xi32, #tpu.memory_space<vmem>>, vector<16x1xi32>
      %c-100_i32 = arith.constant -100 : i32
      %52 = vector.broadcast %c-100_i32 : i32 to vector<16x1xi32>
      %53 = arith.cmpi ne, %51, %52 : vector<16x1xi32>
      %54 = arith.addf %47, %50 : vector<16x1xf32>
      %cst_33 = arith.constant 0.000000e+00 : f32
      %55 = vector.broadcast %cst_33 : f32 to vector<16x1xf32>
      %56 = arith.select %53, %54, %55 : vector<16x1xi1>, vector<16x1xf32>
      %cst_34 = arith.constant 0.000000e+00 : f32
      %57 = vector.broadcast %cst_34 : f32 to vector<16x1xf32>
      %58 = arith.select %53, %50, %57 : vector<16x1xi1>, vector<16x1xf32>
      %59 = tpu.concatenate %56, %58 in 1 : vector<16x1xf32>, vector<16x1xf32> -> vector<16x2xf32>
      %c0_35 = arith.constant 0 : index
      %c0_36 = arith.constant 0 : index
      %60 = vector.load %arg6[%c0_35, %c0_36] : memref<16x2xf32, #tpu.memory_space<vmem>>, vector<16x2xf32>
      tpu.vector_store %arg6[%c0_35, %c0_36], %59 {strides = array<i32>} : memref<16x2xf32, #tpu.memory_space<vmem>>, vector<16x2xf32>,
    } else {
    }
    return
  }
  func.func @transform_0(%arg0: i32, %arg1: i32) -> (i32, i32) {
    %c0_i32 = arith.constant 0 : i32
    %c0_i32_0 = arith.constant 0 : i32
    return %arg0, %c0_i32 : i32, i32
  }
  func.func @transform_1(%arg0: i32, %arg1: i32) -> (i32, i32) {
    %c0_i32 = arith.constant 0 : i32
    %c0_i32_0 = arith.constant 0 : i32
    return %arg1, %c0_i32 : i32, i32
  }
  func.func @transform_2(%arg0: i32, %arg1: i32) -> (i32, i32) {
    %c0_i32 = arith.constant 0 : i32
    %c0_i32_0 = arith.constant 0 : i32
    return %c0_i32, %arg1 : i32, i32
  }
  func.func @transform_3(%arg0: i32, %arg1: i32) -> (i32, i32) {
    %c0_i32 = arith.constant 0 : i32
    %c0_i32_0 = arith.constant 0 : i32
    return %arg0, %c0_i32 : i32, i32
  }
  func.func @transform_4(%arg0: i32, %arg1: i32) -> (i32, i32) {
    %c0_i32 = arith.constant 0 : i32
    %c0_i32_0 = arith.constant 0 : i32
    return %arg0, %c0_i32 : i32, i32
  }
}

</mosaic_0001>

<llo_original>
// kernel: fused_linear_cross_entropy.1
$region0: #{fused_linear_cross_entropy.1}
  #allocation0 [shape = 'u32[]', space=smem, size = 0x4, offset = 0x4, fixed_abs, tag = 'smem constant byte address 0x4 - core index']
  #allocation1 [shape = 'u32[144,128]{1,0:T(1,128)}', space=vmem, size = 0x12000, scoped, tag = 'internal scratch']
  #allocation2 [shape = 'f32[16,8]{1,0:T(8,128)}', space=vmem, size = 0x2000, scoped, tag = 'scratch operand']
  %s0 = inlined_call_operand.vmem [shape: f32[16,32], index: 0, kind: input, shape index: {}]
  %s1 = inlined_call_operand.vmem [shape: f32[256,32], index: 1, kind: input, shape index: {}]
  %s2 = inlined_call_operand.vmem [shape: f32[1,256], index: 2, kind: input, shape index: {}]
  %s3 = inlined_call_operand.vmem [shape: s32[16,1], index: 3, kind: input, shape index: {}]
  %s4 = inlined_call_operand.vmem [shape: f32[16,2], index: 4, kind: output, shape index: {}]
  %s5 = sld [smem:[#allocation0]]
  $region34: #{fused_linear_cross_entropy.1} parent=0
    _
  %s7 = ssub.s32 1, %s5
  %s8 = scalar_select 0, %s7, %s5
  // Predicated region
  $region2: #{fused_linear_cross_entropy.1} parent=0 // pred_check
    _
  $region3: #{fused_linear_cross_entropy.1} parent=0 // pred_check_branch
    %10 = sbr.rel (0) target = $region5
  $region4: #{fused_linear_cross_entropy.1} parent=0 // pred_region
    _
  $region5: #{fused_linear_cross_entropy.1} parent=0 // pred_fallthru
    _
  // Predicated region
  $region6: #{fused_linear_cross_entropy.1} parent=0 // pred_check
    _
  $region7: #{fused_linear_cross_entropy.1} parent=0 // pred_check_branch
    %12 = sbr.rel (0) target = $region9
  $region8: #{fused_linear_cross_entropy.1} parent=0 // pred_region
    _
  $region9: #{fused_linear_cross_entropy.1} parent=0 // pred_fallthru
    _
  // Predicated region
  $region10: #{fused_linear_cross_entropy.1} parent=0 // pred_check
    _
  $region11: #{fused_linear_cross_entropy.1} parent=0 // pred_check_branch
    %14 = sbr.rel (0) target = $region13
  $region12: #{fused_linear_cross_entropy.1} parent=0 // pred_region
    _
  $region13: #{fused_linear_cross_entropy.1} parent=0 // pred_fallthru
    _
  // Predicated region
  $region14: #{fused_linear_cross_entropy.1} parent=0 // pred_check
    _
  $region15: #{fused_linear_cross_entropy.1} parent=0 // pred_check_branch
    %16 = sbr.rel (0) target = $region17
  $region16: #{fused_linear_cross_entropy.1} parent=0 // pred_region
    _
  $region17: #{fused_linear_cross_entropy.1} parent=0 // pred_fallthru
    _
  %p17 = scmp.eq.s32.totalorder 0, 0
  // Predicated region
  $region18: #{fused_linear_cross_entropy.1} parent=0 // pred_check
    %p18 = pneg %p17
  $region19: #{fused_linear_cross_entropy.1} parent=0 // pred_check_branch
    %20 = sbr.rel (%p18) target = $region21
  $region20: #{fused_linear_cross_entropy.1} parent=0 // pred_region
    %v21 = vlaneseq
    %v22 = vand.u32 %v21, 127
    %vm23 = vcmp.eq.s32.totalorder %v22, 0
    %v24 = vsel %vm23, -inf, 0.0
    %vm25 = vcmask 64512
    %26 = vst.msk [vmem:[#allocation2] sm:$0xff] %vm25, %v24
    %27 = vst.msk [vmem:[#allocation2 + $0x8] sm:$0xff] %vm25, %v24
  $region21: #{fused_linear_cross_entropy.1} parent=0 // pred_fallthru
    _
  %v28 = vld [vmem:[%s0] sm:$0xff]
  %v29 = vld [vmem:[%s0 + $0x8] sm:$0xff]
  %v30 = vld [vmem:[%s1] sm:$0xff]
  %v31 = vld [vmem:[%s1 + $0x8] sm:$0xff]
  %v32 = vld [vmem:[%s1 + $0x10] sm:$0xff]
  %v33 = vld [vmem:[%s1 + $0x18] sm:$0xff]
  %v34 = vld [vmem:[%s1 + $0x20] sm:$0xff]
  %v35 = vld [vmem:[%s1 + $0x28] sm:$0xff]
  %v36 = vld [vmem:[%s1 + $0x30] sm:$0xff]
  %v37 = vld [vmem:[%s1 + $0x38] sm:$0xff]
  %v38 = vld [vmem:[%s1 + $0x40] sm:$0xff]
  %v39 = vld [vmem:[%s1 + $0x48] sm:$0xff]
  %v40 = vld [vmem:[%s1 + $0x50] sm:$0xff]
  %v41 = vld [vmem:[%s1 + $0x58] sm:$0xff]
  %v42 = vld [vmem:[%s1 + $0x60] sm:$0xff]
  %v43 = vld [vmem:[%s1 + $0x68] sm:$0xff]
  %v44 = vld [vmem:[%s1 + $0x70] sm:$0xff]
  %v45 = vld [vmem:[%s1 + $0x78] sm:$0xff]
  %v46 = vld [vmem:[%s1 + $0x80] sm:$0xff]
  %v47 = vld [vmem:[%s1 + $0x88] sm:$0xff]
  %v48 = vld [vmem:[%s1 + $0x90] sm:$0xff]
  %v49 = vld [vmem:[%s1 + $0x98] sm:$0xff]
  %v50 = vld [vmem:[%s1 + $0xa0] sm:$0xff]
  %v51 = vld [vmem:[%s1 + $0xa8] sm:$0xff]
  %v52 = vld [vmem:[%s1 + $0xb0] sm:$0xff]
  %v53 = vld [vmem:[%s1 + $0xb8] sm:$0xff]
  %v54 = vld [vmem:[%s1 + $0xc0] sm:$0xff]
  %v55 = vld [vmem:[%s1 + $0xc8] sm:$0xff]
  %v56 = vld [vmem:[%s1 + $0xd0] sm:$0xff]
  %v57 = vld [vmem:[%s1 + $0xd8] sm:$0xff]
  %v58 = vld [vmem:[%s1 + $0xe0] sm:$0xff]
  %v59 = vld [vmem:[%s1 + $0xe8] sm:$0xff]
  %v60 = vld [vmem:[%s1 + $0xf0] sm:$0xff]
  %v61 = vld [vmem:[%s1 + $0xf8] sm:$0xff]
  %v62 = vld [vmem:[%s2] sm:$0x3]
  %v64 = vlaneseq
  %v65 = vshrl.u32 %v64, 7
  %v66 = vsub.s32 0, %v65
  %v67 = vrot.slane %v62, %v66
  %v68 = vlaneseq
  %v69 = vshrl.u32 %v68, 7
  %v70 = vsub.s32 1, %v69
  %v71 = vrot.slane %v62, %v70
  %vm74 = vcmask 261120
  %v76 = vsel %vm74, %v28, 0
  %v79 = vsel %vm74, %v29, 0
  %v82 = vsel %vm74, %v30, 0
  %v85 = vsel %vm74, %v31, 0
  %v88 = vsel %vm74, %v32, 0
  %v91 = vsel %vm74, %v33, 0
  %v94 = vsel %vm74, %v34, 0
  %v97 = vsel %vm74, %v35, 0
  %v100 = vsel %vm74, %v36, 0
  %v103 = vsel %vm74, %v37, 0
  %v106 = vsel %vm74, %v38, 0
  %v109 = vsel %vm74, %v39, 0
  %v112 = vsel %vm74, %v40, 0
  %v115 = vsel %vm74, %v41, 0
  %v118 = vsel %vm74, %v42, 0
  %v121 = vsel %vm74, %v43, 0
  %v124 = vsel %vm74, %v44, 0
  %v127 = vsel %vm74, %v45, 0
  %v130 = vsel %vm74, %v46, 0
  %v133 = vsel %vm74, %v47, 0
  %v136 = vsel %vm74, %v48, 0
  %v139 = vsel %vm74, %v49, 0
  %v142 = vsel %vm74, %v50, 0
  %v145 = vsel %vm74, %v51, 0
  %v148 = vsel %vm74, %v52, 0
  %v151 = vsel %vm74, %v53, 0
  %v154 = vsel %vm74, %v54, 0
  %v157 = vsel %vm74, %v55, 0
  %v160 = vsel %vm74, %v56, 0
  %v163 = vsel %vm74, %v57, 0
  %v166 = vsel %vm74, %v58, 0
  %v169 = vsel %vm74, %v59, 0
  %v172 = vsel %vm74, %v60, 0
  %v175 = vsel %vm74, %v61, 0
  %177 = vmatprep.subr.mxu0 0.0
  %178 = vmatpush1.xpose.msra.mxu0 %v127
  %179 = vmatprep.subr.mxu0 0.0
  %180 = vmatpush1.xpose.msra.mxu0 %v124
  %181 = vmatprep.subr.mxu0 0.0
  %182 = vmatpush1.xpose.msra.mxu0 %v121
  %183 = vmatprep.subr.mxu0 0.0
  %184 = vmatpush1.xpose.msra.mxu0 %v118
  %185 = vmatprep.subr.mxu0 0.0
  %186 = vmatpush1.xpose.msra.mxu0 %v115
  %187 = vmatprep.subr.mxu0 0.0
  %188 = vmatpush1.xpose.msra.mxu0 %v112
  %189 = vmatprep.subr.mxu0 0.0
  %190 = vmatpush1.xpose.msra.mxu0 %v109
  %191 = vmatprep.subr.mxu0 0.0
  %192 = vmatpush1.xpose.msra.mxu0 %v106
  %193 = vmatprep.subr.mxu0 0.0
  %194 = vmatpush1.xpose.msra.mxu0 %v103
  %195 = vmatprep.subr.mxu0 0.0
  %196 = vmatpush1.xpose.msra.mxu0 %v100
  %197 = vmatprep.subr.mxu0 0.0
  %198 = vmatpush1.xpose.msra.mxu0 %v97
  %199 = vmatprep.subr.mxu0 0.0
  %200 = vmatpush1.xpose.msra.mxu0 %v94
  %201 = vmatprep.subr.mxu0 0.0
  %202 = vmatpush1.xpose.msra.mxu0 %v91
  %203 = vmatprep.subr.mxu0 0.0
  %204 = vmatpush1.xpose.msra.mxu0 %v88
  %205 = vmatprep.subr.mxu0 0.0
  %206 = vmatpush1.xpose.msra.mxu0 %v85
  %207 = vmatprep.subr.mxu0 0.0
  %208 = vmatpush1.xpose.msra.mxu0 %v82
  %209 = vmatprep.subr.mxu0 0.0
  %210 = vmatpush2.xpose.msra.mxu0 %v175
  %211 = vmatprep.subr.mxu0 0.0
  %212 = vmatpush2.xpose.msra.mxu0 %v172
  %213 = vmatprep.subr.mxu0 0.0
  %214 = vmatpush2.xpose.msra.mxu0 %v169
  %215 = vmatprep.subr.mxu0 0.0
  %216 = vmatpush2.xpose.msra.mxu0 %v166
  %217 = vmatprep.subr.mxu0 0.0
  %218 = vmatpush2.xpose.msra.mxu0 %v163
  %219 = vmatprep.subr.mxu0 0.0
  %220 = vmatpush2.xpose.msra.mxu0 %v160
  %221 = vmatprep.subr.mxu0 0.0
  %222 = vmatpush2.xpose.msra.mxu0 %v157
  %223 = vmatprep.subr.mxu0 0.0
  %224 = vmatpush2.xpose.msra.mxu0 %v154
  %225 = vmatprep.subr.mxu0 0.0
  %226 = vmatpush2.xpose.msra.mxu0 %v151
  %227 = vmatprep.subr.mxu0 0.0
  %228 = vmatpush2.xpose.msra.mxu0 %v148
  %229 = vmatprep.subr.mxu0 0.0
  %230 = vmatpush2.xpose.msra.mxu0 %v145
  %231 = vmatprep.subr.mxu0 0.0
  %232 = vmatpush2.xpose.msra.mxu0 %v142
  %233 = vmatprep.subr.mxu0 0.0
  %234 = vmatpush2.xpose.msra.mxu0 %v139
  %235 = vmatprep.subr.mxu0 0.0
  %236 = vmatpush2.xpose.msra.mxu0 %v136
  %237 = vmatprep.subr.mxu0 0.0
  %238 = vmatpush2.xpose.msra.mxu0 %v133
  %239 = vmatprep.subr.mxu0 0.0
  %240 = vmatpush2.xpose.msra.mxu0 %v130
  %241 = vmatprep.mubr.f32.mxu0 0.0
  %242 = vmatmul.mubr.f32.gmra.mxu0 %v76
  %v243 = vpop.f32.mrf.mxu0
  %v244 = vadd.f32 %v67, %v243
  %v245 = vpop.f32.mrf.mxu0
  %v246 = vadd.f32 %v71, %v245
  %247 = vmatprep.mubr.f32.mxu0 0.0
  %248 = vmatmul.mubr.f32.gmra.mxu0 %v79
  %v249 = vpop.f32.mrf.mxu0
  %v250 = vadd.f32 %v67, %v249
  %v251 = vpop.f32.mrf.mxu0
  %v252 = vadd.f32 %v71, %v251
  %253 = vdwg.mxu0
  %v254 = vld [vmem:[#allocation2] sm:$0xff]
  %v255 = vld [vmem:[#allocation2 + $0x8] sm:$0xff]
  %v256 = vmax.f32 %v244, %v246
  %257 = vmax.xlane.f32.xlu0 %v256
  %v258 = vpop.xlane.xlu0 %257
  %v259 = vmax.f32 %v250, %v252
  %260 = vmax.xlane.f32.xlu0 %v259
  %v261 = vpop.xlane.xlu0 %260
  %v262 = vmax.f32 %v254, %v258
  %v263 = vmax.f32 %v255, %v261
  %265 = vset.pattern.permute.xlu0 0
  %266 = vperm.xlu0 %265, %v262
  %v267 = vpop.permute.xlu0 %266
  %270 = vset.pattern.permute.xlu0 0
  %271 = vperm.xlu0 %270, %v263
  %v272 = vpop.permute.xlu0 %271
  %v274 = vsub.f32 %v244, %v267
  %v275 = vsub.f32 %v246, %v267
  %v276 = vsub.f32 %v250, %v272
  %v277 = vsub.f32 %v252, %v272
  %v278 = vmul.f32 %v274, 1.442695
  %v279 = vpow.pop %v278
  %v280 = vmul.f32 %v275, 1.442695
  %v281 = vpow.pop %v280
  %v282 = vmul.f32 %v276, 1.442695
  %v283 = vpow.pop %v282
  %v284 = vmul.f32 %v277, 1.442695
  %v285 = vpow.pop %v284
  %v286 = vsub.f32 %v254, %v262
  %v287 = vsub.f32 %v255, %v263
  %v288 = vmul.f32 %v286, 1.442695
  %v289 = vpow.pop %v288
  %v290 = vmul.f32 %v287, 1.442695
  %v291 = vpow.pop %v290
  %294 = vrot.lane.b32.xlu0 %v289, 1
  %v295 = vpop.permute.xlu0 %294
  %296 = vrot.lane.b32.xlu0 %v291, 1
  %v297 = vpop.permute.xlu0 %296
  %v300 = vmul.f32 %v254, %v295
  %v301 = vmul.f32 %v255, %v297
  %v302 = vadd.f32 %v279, %v281
  %303 = vadd.xlane.f32.xlu0 %v302
  %v304 = vpop.xlane.xlu0 %303
  %v305 = vadd.f32 %v283, %v285
  %306 = vadd.xlane.f32.xlu0 %v305
  %v307 = vpop.xlane.xlu0 %306
  %v308 = vadd.f32 %v300, %v304
  %v309 = vadd.f32 %v301, %v307
  %v310 = vld [vmem:[%s3] sm:$0xff]
  %v311 = vld [vmem:[%s3 + $0x8] sm:$0xff]
  %s312 = smul.u32 0, 256
  %v313 = vstv %s312
  %v314 = vsub.s32 %v310, %v313
  %v315 = vsub.s32 %v311, %v313
  %v316 = vlaneseq
  %v317 = vand.u32 %v316, 127
  %v318 = vadd.s32 %v317, 128
  %319 = vset.pattern.permute.xlu0 0
  %320 = vperm.xlu0 %319, %v314
  %v321 = vpop.permute.xlu0 %320
  %322 = vset.pattern.permute.xlu0 0
  %323 = vperm.xlu0 %322, %v315
  %v324 = vpop.permute.xlu0 %323
  %vm325 = vcmp.eq.s32.totalorder %v317, %v321
  %vm326 = vcmp.eq.s32.totalorder %v318, %v321
  %vm327 = vcmp.eq.s32.totalorder %v317, %v324
  %vm328 = vcmp.eq.s32.totalorder %v318, %v324
  %v329 = vsel %vm325, %v244, 0.0
  %v330 = vsel %vm326, %v246, 0.0
  %v331 = vsel %vm327, %v250, 0.0
  %v332 = vsel %vm328, %v252, 0.0
  %v333 = vadd.f32 %v329, %v330
  %334 = vadd.xlane.f32.xlu0 %v333
  %v335 = vpop.xlane.xlu0 %334
  %v336 = vadd.f32 %v331, %v332
  %337 = vadd.xlane.f32.xlu0 %v336
  %v338 = vpop.xlane.xlu0 %337
  %v339 = vadd.f32 %v254, %v335
  %v340 = vadd.f32 %v255, %v338
  %vm341 = vcmask 7168
  %342 = vst.msk [vmem:[#allocation2] sm:$0xff] %vm341, %v262
  %343 = vst.msk [vmem:[#allocation2 + $0x8] sm:$0xff] %vm341, %v263
  %vm344 = vcmask 15368
  %345 = vst.msk [vmem:[#allocation2] sm:$0xff] %vm344, %v308
  %346 = vst.msk [vmem:[#allocation2 + $0x8] sm:$0xff] %vm344, %v309
  %vm347 = vcmask 23568
  %348 = vst.msk [vmem:[#allocation2] sm:$0xff] %vm347, %v339
  %349 = vst.msk [vmem:[#allocation2 + $0x8] sm:$0xff] %vm347, %v340
  // Predicated region
  $region22: #{fused_linear_cross_entropy.1} parent=0 // pred_check
    %p350 = pneg %p17
  $region23: #{fused_linear_cross_entropy.1} parent=0 // pred_check_branch
    %352 = sbr.rel (%p350) target = $region25
  $region24: #{fused_linear_cross_entropy.1} parent=0 // pred_region
    %v353 = vld [vmem:[#allocation2] sm:$0xff]
    %v354 = vld [vmem:[#allocation2 + $0x8] sm:$0xff]
    %v355 = vlog2.pop %v353
    %v356 = vmul.f32 %v355, 0.6931472
    %v357 = vlog2.pop %v354
    %v358 = vmul.f32 %v357, 0.6931472
    %361 = vrot.lane.b32.xlu0 %v356, 127
    %v362 = vpop.permute.xlu0 %361
    %363 = vrot.lane.b32.xlu0 %v358, 127
    %v364 = vpop.permute.xlu0 %363
    %v367 = vadd.f32 %v353, %v362
    %v368 = vadd.f32 %v354, %v364
    %371 = vrot.lane.b32.xlu0 %v353, 126
    %v372 = vpop.permute.xlu0 %371
    %373 = vrot.lane.b32.xlu0 %v354, 126
    %v374 = vpop.permute.xlu0 %373
    %v377 = vsub.f32 %v367, %v372
    %v378 = vsub.f32 %v368, %v374
    %v379 = vmul.f32 %v367, 0.1
    %v380 = vmul.f32 %v368, 0.1
    %v381 = vmul.f32 %v379, %v367
    %v382 = vmul.f32 %v380, %v368
    %v383 = vld [vmem:[%s3] sm:$0xff]
    %v384 = vld [vmem:[%s3 + $0x8] sm:$0xff]
    %vm385 = vcmp.ne.s32.totalorder %v383, 4294967196
    %vm386 = vcmp.ne.s32.totalorder %v384, 4294967196
    %v387 = vadd.f32 %v377, %v381
    %v388 = vadd.f32 %v378, %v382
    %v389 = vsel %vm385, %v387, 0.0
    %v390 = vsel %vm386, %v388, 0.0
    %v391 = vsel %vm385, %v381, 0.0
    %v392 = vsel %vm386, %v382, 0.0
    %395 = vrot.lane.b32.xlu0 %v391, 1
    %v396 = vpop.permute.xlu0 %395
    %397 = vrot.lane.b32.xlu0 %v392, 1
    %v398 = vpop.permute.xlu0 %397
    %v401 = vsel %vm341, %v389, %v396
    %v402 = vsel %vm341, %v390, %v398
    %vm403 = vcmask 15360
    %404 = vst.msk [vmem:[%s4] sm:$0xff] %vm403, %v401
    %405 = vst.msk [vmem:[%s4 + $0x8] sm:$0xff] %vm403, %v402
  $region25: #{fused_linear_cross_entropy.1} parent=0 // pred_fallthru
    _
  // Predicated region
  $region26: #{fused_linear_cross_entropy.1} parent=0 // pred_check
    _
  $region27: #{fused_linear_cross_entropy.1} parent=0 // pred_check_branch
    %407 = sbr.rel (0) target = $region29
  $region28: #{fused_linear_cross_entropy.1} parent=0 // pred_region
    _
  $region29: #{fused_linear_cross_entropy.1} parent=0 // pred_fallthru
    _
  // Predicated region
  $region30: #{fused_linear_cross_entropy.1} parent=0 // pred_check
    _
  $region31: #{fused_linear_cross_entropy.1} parent=0 // pred_check_branch
    %409 = sbr.rel (0) target = $region33
  $region32: #{fused_linear_cross_entropy.1} parent=0 // pred_region
    _
  $region33: #{fused_linear_cross_entropy.1} parent=0 // pred_fallthru
    _

</llo_original>
